<compile_context>
chip_gen: v6e
topology: v6e:2x2x1
jax: 0.10.0
libtpu: 0.0.40
codegen_flags: <defaults>
</compile_context>

<pallas_src>
import math
import functools

import jax
import jax.numpy as jnp
from jax.experimental import pallas as pl
from jax.experimental.pallas import tpu as pltpu


def _round_up(x: int, m: int) -> int:
    return ((x + m - 1) // m) * m


def actor_kernel(x_ref, wcat_ref, bcat_ref, w3_ref, b3_ref, w4_ref, b4_ref,
                 out_ref, *, max_action: float):
    # h1 = relu(concat(prev, state) @ blockdiag(W1, W2) + concat(b1, b2))
    h1 = jnp.dot(x_ref[...], wcat_ref[...], preferred_element_type=jnp.float32)
    h1 = jnp.maximum(h1 + bcat_ref[...], 0.0).astype(jnp.bfloat16)

    # h2 = relu(h1 @ W3 + b3)  -- single full K=512 contraction
    h2 = jnp.dot(h1, w3_ref[...], preferred_element_type=jnp.float32)
    h2 = jnp.maximum(h2 + b3_ref[...], 0.0).astype(jnp.bfloat16)

    # out = max_action * tanh(h2 @ W4_padded + b4_padded)  (lane-dense 128 cols)
    o = jnp.dot(h2, w4_ref[...], preferred_element_type=jnp.float32)
    out_ref[...] = max_action * jnp.tanh(o + b4_ref[...])


@functools.partial(jax.jit, static_argnames=("max_action", "block_b"))
def actor_forward(previous_state, state, params, max_action, *, block_b=256):
    """params: W1..W4 stored [in, out] (so the kernel does x @ W), biases [1, out]."""
    B, prev_dim = previous_state.shape
    state_dim = state.shape[1]
    in_total = prev_dim + state_dim

    h1a = params["w1"].shape[1]           # 128
    h1_dim = h1a + params["w2"].shape[1]  # 512
    h2_dim = params["w3"].shape[1]        # 512
    action_dim = params["w4"].shape[1]
    out_pad = _round_up(max(action_dim, 128), 128)

    # --- fused / padded parameters (built in f32, cast to bf16 for the MXU) ---
    w_cat = jnp.zeros((in_total, h1_dim), jnp.float32)
    w_cat = w_cat.at[:prev_dim, :h1a].set(params["w1"])
    w_cat = w_cat.at[prev_dim:, h1a:].set(params["w2"])
    b_cat = jnp.concatenate([params["b1"], params["b2"]], axis=1)      # [1, 512]

    w4p = jnp.zeros((h2_dim, out_pad), jnp.float32).at[:, :action_dim].set(params["w4"])
    b4p = jnp.zeros((1, out_pad), jnp.float32).at[:, :action_dim].set(params["b4"])

    w_cat_b = w_cat.astype(jnp.bfloat16)
    w3_b = params["w3"].astype(jnp.bfloat16)
    w4_b = w4p.astype(jnp.bfloat16)

    # --- batch tiling: pad rows to a multiple of the row-block size ---
    block_b = min(block_b, _round_up(B, 8))
    Bp = _round_up(B, block_b)
    x = jnp.concatenate([previous_state, state], axis=1)
    if Bp != B:
        x = jnp.pad(x, ((0, Bp - B), (0, 0)))
    x = x.astype(jnp.bfloat16)

    grid = (Bp // block_b,)

    in_specs = [
        pl.BlockSpec((block_b, in_total), lambda i: (i, 0)),   # activations stream
        pl.BlockSpec((in_total, h1_dim), lambda i: (0, 0)),    # weights stay resident
        pl.BlockSpec((1, h1_dim), lambda i: (0, 0)),
        pl.BlockSpec((h1_dim, h2_dim), lambda i: (0, 0)),
        pl.BlockSpec((1, h2_dim), lambda i: (0, 0)),
        pl.BlockSpec((h2_dim, out_pad), lambda i: (0, 0)),
        pl.BlockSpec((1, out_pad), lambda i: (0, 0)),
    ]
    out_specs = pl.BlockSpec((block_b, out_pad), lambda i: (i, 0))

    flops = 2 * Bp * (in_total * h1_dim + h1_dim * h2_dim + h2_dim * out_pad)
    bytes_accessed = (
        x.size * 2 + Bp * out_pad * 4
        + (w_cat_b.size + w3_b.size + w4_b.size) * 2
        + (b_cat.size + params["b3"].size + b4p.size) * 4
    )
    cost = pl.CostEstimate(flops=flops, transcendentals=Bp * out_pad,
                           bytes_accessed=bytes_accessed)

    kernel = functools.partial(actor_kernel, max_action=float(max_action))

    out = pl.pallas_call(
        kernel,
        out_shape=jax.ShapeDtypeStruct((Bp, out_pad), jnp.float32),
        grid=grid,
        in_specs=in_specs,
        out_specs=out_specs,
        compiler_params=pltpu.CompilerParams(
            dimension_semantics=("parallel",),
        ),
        cost_estimate=cost,
    )(x, w_cat_b, b_cat, w3_b, params["b3"], w4_b, b4p)

    return out[:B, :action_dim]


def init_params(key, state_dim, action_dim, n_step):
    """Deterministic synthetic init (PyTorch-Linear-like uniform), [in,out] layout."""
    prev_dim = n_step * math.ceil(state_dim / n_step)
    dims = [
        ("w1", "b1", prev_dim, 128),
        ("w2", "b2", state_dim, 384),
        ("w3", "b3", 512, 512),
        ("w4", "b4", 512, action_dim),
    ]
    params = {}
    for wname, bname, fan_in, fan_out in dims:
        key, kw, kb = jax.random.split(key, 3)
        bound = 1.0 / math.sqrt(fan_in)
        params[wname] = jax.random.uniform(
            kw, (fan_in, fan_out), jnp.float32, -bound, bound)
        params[bname] = jax.random.uniform(
            kb, (1, fan_out), jnp.float32, -bound, bound)
    return params


def actor_reference(previous_state, state, params, max_action):
    a = jax.nn.relu(previous_state @ params["w1"] + params["b1"])
    b = jax.nn.relu(state @ params["w2"] + params["b2"])
    c = jnp.concatenate([a, b], axis=1)
    c = jax.nn.relu(c @ params["w3"] + params["b3"])
    return max_action * jnp.tanh(c @ params["w4"] + params["b4"])


if __name__ == "__main__":
    # Small, forward-consistent shapes.
    batch = 2
    state_dim = 16
    n_step = 4
    action_dim = 4
    max_action = 2.0
    prev_dim = n_step * math.ceil(state_dim / n_step)  # = 16

    key = jax.random.PRNGKey(0)
    key, kp, ks = jax.random.split(key, 3)
    previous_state = jax.random.normal(kp, (batch, prev_dim), jnp.float32)
    state = jax.random.normal(ks, (batch, state_dim), jnp.float32)
    params = init_params(key, state_dim, action_dim, n_step)

    out = actor_forward(previous_state, state, params, max_action)
    out = jax.block_until_ready(out)

    ref = actor_reference(previous_state, state, params, max_action)
    assert out.shape == (batch, action_dim)
    # bf16 matmul inputs with f32 accumulation -> loosened tolerance.
    assert jnp.allclose(out, ref, atol=5e-2, rtol=5e-2), "mismatch vs reference"

    print("KERNEL_OK")
</pallas_src>

<mosaic_0001>
module attributes {stable_mosaic.version = 11 : i64} {
  func.func @actor_kernel(%arg0: i32, %arg1: memref<8x32xbf16, #tpu.memory_space<vmem>>, %arg2: memref<32x512xbf16, #tpu.memory_space<vmem>>, %arg3: memref<1x512xf32, #tpu.memory_space<vmem>>, %arg4: memref<512x512xbf16, #tpu.memory_space<vmem>>, %arg5: memref<1x512xf32, #tpu.memory_space<vmem>>, %arg6: memref<512x128xbf16, #tpu.memory_space<vmem>>, %arg7: memref<1x128xf32, #tpu.memory_space<vmem>>, %arg8: memref<8x128xf32, #tpu.memory_space<vmem>>) attributes {dimension_semantics = [#tpu.dimension_semantics<parallel>], iteration_bounds = array<i64: 1>, scalar_prefetch = 0 : i64, scratch_operands = 0 : i64, tpu.core_type = #tpu.core_type<tc>, window_params = [{transform_indices = @transform_0, window_bounds = array<i64: 8, 32>}, {pipeline_mode = #tpu.pipeline_mode<synchronous>, transform_indices = @transform_1, window_bounds = array<i64: 32, 512>}, {pipeline_mode = #tpu.pipeline_mode<synchronous>, transform_indices = @transform_2, window_bounds = array<i64: 1, 512>}, {pipeline_mode = #tpu.pipeline_mode<synchronous>, transform_indices = @transform_3, window_bounds = array<i64: 512, 512>}, {pipeline_mode = #tpu.pipeline_mode<synchronous>, transform_indices = @transform_4, window_bounds = array<i64: 1, 512>}, {pipeline_mode = #tpu.pipeline_mode<synchronous>, transform_indices = @transform_5, window_bounds = array<i64: 512, 128>}, {pipeline_mode = #tpu.pipeline_mode<synchronous>, transform_indices = @transform_6, window_bounds = array<i64: 1, 128>}, {transform_indices = @transform_7, window_bounds = array<i64: 8, 128>}]} {
    %c0 = arith.constant 0 : index
    %c0_0 = arith.constant 0 : index
    %0 = vector.load %arg1[%c0, %c0_0] : memref<8x32xbf16, #tpu.memory_space<vmem>>, vector<8x32xbf16>
    %c0_1 = arith.constant 0 : index
    %c0_2 = arith.constant 0 : index
    %1 = vector.load %arg2[%c0_1, %c0_2] : memref<32x512xbf16, #tpu.memory_space<vmem>>, vector<32x512xbf16>
    %cst = arith.constant dense<0.000000e+00> : vector<8x512xf32>
    %2 = tpu.matmul %0, %1, %cst {dimension_numbers = #tpu.dot_dimension_numbers<[1], [0], [0], [1], [0, 0, 1, 1], [], []>} : vector<8x32xbf16>, vector<32x512xbf16>, vector<8x512xf32> -> vector<8x512xf32>
    %c0_3 = arith.constant 0 : index
    %c0_4 = arith.constant 0 : index
    %3 = vector.load %arg3[%c0_3, %c0_4] : memref<1x512xf32, #tpu.memory_space<vmem>>, vector<1x512xf32>
    %4 = vector.broadcast %3 : vector<1x512xf32> to vector<8x512xf32>
    %5 = arith.addf %2, %4 : vector<8x512xf32>
    %cst_5 = arith.constant 0.000000e+00 : f32
    %6 = vector.broadcast %cst_5 : f32 to vector<8x512xf32>
    %7 = arith.maximumf %5, %6 : vector<8x512xf32>
    %8 = arith.truncf %7 : vector<8x512xf32> to vector<8x512xbf16>
    %c0_6 = arith.constant 0 : index
    %c0_7 = arith.constant 0 : index
    %9 = vector.load %arg4[%c0_6, %c0_7] : memref<512x512xbf16, #tpu.memory_space<vmem>>, vector<512x512xbf16>
    %cst_8 = arith.constant dense<0.000000e+00> : vector<8x512xf32>
    %10 = tpu.matmul %8, %9, %cst_8 {dimension_numbers = #tpu.dot_dimension_numbers<[1], [0], [0], [1], [0, 0, 1, 1], [], []>} : vector<8x512xbf16>, vector<512x512xbf16>, vector<8x512xf32> -> vector<8x512xf32>
    %c0_9 = arith.constant 0 : index
    %c0_10 = arith.constant 0 : index
    %11 = vector.load %arg5[%c0_9, %c0_10] : memref<1x512xf32, #tpu.memory_space<vmem>>, vector<1x512xf32>
    %12 = vector.broadcast %11 : vector<1x512xf32> to vector<8x512xf32>
    %13 = arith.addf %10, %12 : vector<8x512xf32>
    %cst_11 = arith.constant 0.000000e+00 : f32
    %14 = vector.broadcast %cst_11 : f32 to vector<8x512xf32>
    %15 = arith.maximumf %13, %14 : vector<8x512xf32>
    %16 = arith.truncf %15 : vector<8x512xf32> to vector<8x512xbf16>
    %c0_12 = arith.constant 0 : index
    %c0_13 = arith.constant 0 : index
    %17 = vector.load %arg6[%c0_12, %c0_13] : memref<512x128xbf16, #tpu.memory_space<vmem>>, vector<512x128xbf16>
    %cst_14 = arith.constant dense<0.000000e+00> : vector<8x128xf32>
    %18 = tpu.matmul %16, %17, %cst_14 {dimension_numbers = #tpu.dot_dimension_numbers<[1], [0], [0], [1], [0, 0, 1, 1], [], []>} : vector<8x512xbf16>, vector<512x128xbf16>, vector<8x128xf32> -> vector<8x128xf32>
    %c0_15 = arith.constant 0 : index
    %c0_16 = arith.constant 0 : index
    %19 = vector.load %arg7[%c0_15, %c0_16] : memref<1x128xf32, #tpu.memory_space<vmem>>, vector<1x128xf32>
    %20 = vector.broadcast %19 : vector<1x128xf32> to vector<8x128xf32>
    %21 = arith.addf %18, %20 : vector<8x128xf32>
    %22 = math.tanh %21 : vector<8x128xf32>
    %cst_17 = arith.constant 2.000000e+00 : f32
    %23 = vector.broadcast %cst_17 : f32 to vector<8x128xf32>
    %24 = arith.mulf %23, %22 : vector<8x128xf32>
    %c0_18 = arith.constant 0 : index
    %c0_19 = arith.constant 0 : index
    %25 = vector.load %arg8[%c0_18, %c0_19] : memref<8x128xf32, #tpu.memory_space<vmem>>, vector<8x128xf32>
    tpu.vector_store %arg8[%c0_18, %c0_19], %24 {strides = array<i32>} : memref<8x128xf32, #tpu.memory_space<vmem>>, vector<8x128xf32>,
    return
  }
  func.func @transform_0(%arg0: i32) -> (i32, i32) {
    %c0_i32 = arith.constant 0 : i32
    %c0_i32_0 = arith.constant 0 : i32
    return %arg0, %c0_i32 : i32, i32
  }
  func.func @transform_1(%arg0: i32) -> (i32, i32) {
    %c0_i32 = arith.constant 0 : i32
    %c0_i32_0 = arith.constant 0 : i32
    %c0_i32_1 = arith.constant 0 : i32
    return %c0_i32, %c0_i32_0 : i32, i32
  }
  func.func @transform_2(%arg0: i32) -> (i32, i32) {
    %c0_i32 = arith.constant 0 : i32
    %c0_i32_0 = arith.constant 0 : i32
    %c0_i32_1 = arith.constant 0 : i32
    return %c0_i32, %c0_i32_0 : i32, i32
  }
  func.func @transform_3(%arg0: i32) -> (i32, i32) {
    %c0_i32 = arith.constant 0 : i32
    %c0_i32_0 = arith.constant 0 : i32
    %c0_i32_1 = arith.constant 0 : i32
    return %c0_i32, %c0_i32_0 : i32, i32
  }
  func.func @transform_4(%arg0: i32) -> (i32, i32) {
    %c0_i32 = arith.constant 0 : i32
    %c0_i32_0 = arith.constant 0 : i32
    %c0_i32_1 = arith.constant 0 : i32
    return %c0_i32, %c0_i32_0 : i32, i32
  }
  func.func @transform_5(%arg0: i32) -> (i32, i32) {
    %c0_i32 = arith.constant 0 : i32
    %c0_i32_0 = arith.constant 0 : i32
    %c0_i32_1 = arith.constant 0 : i32
    return %c0_i32, %c0_i32_0 : i32, i32
  }
  func.func @transform_6(%arg0: i32) -> (i32, i32) {
    %c0_i32 = arith.constant 0 : i32
    %c0_i32_0 = arith.constant 0 : i32
    %c0_i32_1 = arith.constant 0 : i32
    return %c0_i32, %c0_i32_0 : i32, i32
  }
  func.func @transform_7(%arg0: i32) -> (i32, i32) {
    %c0_i32 = arith.constant 0 : i32
    %c0_i32_0 = arith.constant 0 : i32
    return %arg0, %c0_i32 : i32, i32
  }
}

</mosaic_0001>

<llo_original>
// kernel: actor_forward.1
$region0: #{actor_forward.1}
  #allocation0 [shape = 'u32[]', space=smem, size = 0x4, offset = 0x4, fixed_abs, tag = 'smem constant byte address 0x4 - core index']
  #allocation1 [shape = 'u32[144,128]{1,0:T(1,128)}', space=vmem, size = 0x12000, scoped, tag = 'internal scratch']
  %s0 = inlined_call_operand.vmem [shape: bf16[8,32], index: 0, kind: input, shape index: {}]
  %s1 = inlined_call_operand.vmem [shape: bf16[32,512], index: 1, kind: input, shape index: {}]
  %s2 = inlined_call_operand.vmem [shape: f32[1,512], index: 2, kind: input, shape index: {}]
  %s3 = inlined_call_operand.vmem [shape: bf16[512,512], index: 3, kind: input, shape index: {}]
  %s4 = inlined_call_operand.vmem [shape: f32[1,512], index: 4, kind: input, shape index: {}]
  %s5 = inlined_call_operand.vmem [shape: bf16[512,128], index: 5, kind: input, shape index: {}]
  %s6 = inlined_call_operand.vmem [shape: f32[1,128], index: 6, kind: input, shape index: {}]
  %s7 = inlined_call_operand.vmem [shape: f32[8,128], index: 7, kind: output, shape index: {}]
  %s8 = sld [smem:[#allocation0]]
  $region38: #{actor_forward.1} parent=0
    _
  %s10 = ssub.s32 1, %s8
  %s11 = scalar_select 0, %s10, %s8
  // Predicated region
  $region2: #{actor_forward.1} parent=0 // pred_check
    _
  $region3: #{actor_forward.1} parent=0 // pred_check_branch
    %13 = sbr.rel (0) target = $region5
  $region4: #{actor_forward.1} parent=0 // pred_region
    _
  $region5: #{actor_forward.1} parent=0 // pred_fallthru
    _
  // Predicated region
  $region6: #{actor_forward.1} parent=0 // pred_check
    _
  $region7: #{actor_forward.1} parent=0 // pred_check_branch
    %15 = sbr.rel (0) target = $region9
  $region8: #{actor_forward.1} parent=0 // pred_region
    _
  $region9: #{actor_forward.1} parent=0 // pred_fallthru
    _
  // Predicated region
  $region10: #{actor_forward.1} parent=0 // pred_check
    _
  $region11: #{actor_forward.1} parent=0 // pred_check_branch
    %17 = sbr.rel (0) target = $region13
  $region12: #{actor_forward.1} parent=0 // pred_region
    _
  $region13: #{actor_forward.1} parent=0 // pred_fallthru
    _
  // Predicated region
  $region14: #{actor_forward.1} parent=0 // pred_check
    _
  $region15: #{actor_forward.1} parent=0 // pred_check_branch
    %19 = sbr.rel (0) target = $region17
  $region16: #{actor_forward.1} parent=0 // pred_region
    _
  $region17: #{actor_forward.1} parent=0 // pred_fallthru
    _
  // Predicated region
  $region18: #{actor_forward.1} parent=0 // pred_check
    _
  $region19: #{actor_forward.1} parent=0 // pred_check_branch
    %21 = sbr.rel (0) target = $region21
  $region20: #{actor_forward.1} parent=0 // pred_region
    _
  $region21: #{actor_forward.1} parent=0 // pred_fallthru
    _
  // Predicated region
  $region22: #{actor_forward.1} parent=0 // pred_check
    _
  $region23: #{actor_forward.1} parent=0 // pred_check_branch
    %23 = sbr.rel (0) target = $region25
  $region24: #{actor_forward.1} parent=0 // pred_region
    _
  $region25: #{actor_forward.1} parent=0 // pred_fallthru
    _
  // Predicated region
  $region26: #{actor_forward.1} parent=0 // pred_check
    _
  $region27: #{actor_forward.1} parent=0 // pred_check_branch
    %25 = sbr.rel (0) target = $region29
  $region28: #{actor_forward.1} parent=0 // pred_region
    _
  $region29: #{actor_forward.1} parent=0 // pred_fallthru
    _
  %v27 = vld [vmem:[%s0] sm:$0xf]
  %v28 = vld [vmem:[%s1] sm:$0xff]
  %v29 = vld [vmem:[%s1 + $0x8] sm:$0xff]
  %v30 = vld [vmem:[%s1 + $0x10] sm:$0xff]
  %v31 = vld [vmem:[%s1 + $0x18] sm:$0xff]
  %v32 = vld [vmem:[%s1 + $0x20] sm:$0xff]
  %v33 = vld [vmem:[%s1 + $0x28] sm:$0xff]
  %v34 = vld [vmem:[%s1 + $0x30] sm:$0xff]
  %v35 = vld [vmem:[%s1 + $0x38] sm:$0xff]
  %v36 = vld [vmem:[%s2] sm:$0xf]
  %v38 = vlaneseq
  %v39 = vshrl.u32 %v38, 7
  %v40 = vsub.s32 0, %v39
  %v41 = vrot.slane %v36, %v40
  %v42 = vlaneseq
  %v43 = vshrl.u32 %v42, 7
  %v44 = vsub.s32 1, %v43
  %v45 = vrot.slane %v36, %v44
  %v46 = vlaneseq
  %v47 = vshrl.u32 %v46, 7
  %v48 = vsub.s32 2, %v47
  %v49 = vrot.slane %v36, %v48
  %v50 = vlaneseq
  %v51 = vshrl.u32 %v50, 7
  %v52 = vsub.s32 3, %v51
  %v53 = vrot.slane %v36, %v52
  %v66 = vunpack.c.l.b16 %v28
  %v67 = vunpack.c.h.b16 %v28
  %v68 = vunpack.c.l.b16 %v29
  %v69 = vunpack.c.h.b16 %v29
  %v70 = vunpack.c.l.b16 %v30
  %v71 = vunpack.c.h.b16 %v30
  %v72 = vunpack.c.l.b16 %v31
  %v73 = vunpack.c.h.b16 %v31
  %v74 = vunpack.c.l.b16 %v32
  %v75 = vunpack.c.h.b16 %v32
  %v76 = vunpack.c.l.b16 %v33
  %v77 = vunpack.c.h.b16 %v33
  %v78 = vunpack.c.l.b16 %v34
  %v79 = vunpack.c.h.b16 %v34
  %v80 = vunpack.c.l.b16 %v35
  %v81 = vunpack.c.h.b16 %v35
  %v82 = vpack.c.b16 %v70, %v66
  %v83 = vpack.c.b16 %v71, %v67
  %v84 = vpack.c.b16 %v72, %v68
  %v85 = vpack.c.b16 %v73, %v69
  %v86 = vpack.c.b16 %v78, %v74
  %v87 = vpack.c.b16 %v79, %v75
  %v88 = vpack.c.b16 %v80, %v76
  %v89 = vpack.c.b16 %v81, %v77
  %vm98 = vcmask 261120
  %v100 = vsel %vm98, %v27, 0
  %102 = vmatprep.subr.bf16.mxu0 0
  %103 = vmatpush1.bf16.msra.mxu0 0
  %104 = vmatprep.subr.bf16.mxu0 0
  %105 = vmatpush1.bf16.msra.mxu0 0
  %106 = vmatprep.subr.bf16.mxu0 0
  %107 = vmatpush1.bf16.msra.mxu0 0
  %108 = vmatprep.subr.bf16.mxu0 0
  %109 = vmatpush1.bf16.msra.mxu0 0
  %110 = vmatprep.subr.bf16.mxu0 0
  %111 = vmatpush1.bf16.msra.mxu0 0
  %112 = vmatprep.subr.bf16.mxu0 0
  %113 = vmatpush1.bf16.msra.mxu0 0
  %114 = vmatprep.subr.bf16.mxu0 %v87
  %115 = vmatpush1.bf16.msra.mxu0 %v86
  %116 = vmatprep.subr.bf16.mxu0 %v83
  %117 = vmatpush1.bf16.msra.mxu0 %v82
  %118 = vmatprep.subr.bf16.mxu0 0
  %119 = vmatpush2.bf16.msra.mxu0 0
  %120 = vmatprep.subr.bf16.mxu0 0
  %121 = vmatpush2.bf16.msra.mxu0 0
  %122 = vmatprep.subr.bf16.mxu0 0
  %123 = vmatpush2.bf16.msra.mxu0 0
  %124 = vmatprep.subr.bf16.mxu0 0
  %125 = vmatpush2.bf16.msra.mxu0 0
  %126 = vmatprep.subr.bf16.mxu0 0
  %127 = vmatpush2.bf16.msra.mxu0 0
  %128 = vmatprep.subr.bf16.mxu0 0
  %129 = vmatpush2.bf16.msra.mxu0 0
  %130 = vmatprep.subr.bf16.mxu0 0
  %131 = vmatpush2.bf16.msra.mxu0 0
  %132 = vmatprep.subr.bf16.mxu0 0
  %133 = vmatpush2.bf16.msra.mxu0 0
  %134 = vmatprep.mubr.bf16.mxu0 0
  %135 = vmatmul.mubr.bf16.gmra.mxu0 %v100
  %v136 = vpop.f32.mrf.mxu0
  %v137 = vadd.f32 %v41, %v136
  %v138 = vpop.f32.mrf.mxu0
  %v139 = vadd.f32 %v45, %v138
  %v140 = vpop.f32.mrf.mxu0
  %v141 = vpop.f32.mrf.mxu0
  %142 = vdwg.mxu0
  %143 = vmatprep.subr.bf16.mxu0 0
  %144 = vmatpush1.bf16.msra.mxu0 0
  %145 = vmatprep.subr.bf16.mxu0 0
  %146 = vmatpush1.bf16.msra.mxu0 0
  %147 = vmatprep.subr.bf16.mxu0 0
  %148 = vmatpush1.bf16.msra.mxu0 0
  %149 = vmatprep.subr.bf16.mxu0 0
  %150 = vmatpush1.bf16.msra.mxu0 0
  %151 = vmatprep.subr.bf16.mxu0 0
  %152 = vmatpush1.bf16.msra.mxu0 0
  %153 = vmatprep.subr.bf16.mxu0 0
  %154 = vmatpush1.bf16.msra.mxu0 0
  %155 = vmatprep.subr.bf16.mxu0 %v89
  %156 = vmatpush1.bf16.msra.mxu0 %v88
  %157 = vmatprep.subr.bf16.mxu0 %v85
  %158 = vmatpush1.bf16.msra.mxu0 %v84
  %159 = vmatprep.subr.bf16.mxu0 0
  %160 = vmatpush2.bf16.msra.mxu0 0
  %161 = vmatprep.subr.bf16.mxu0 0
  %162 = vmatpush2.bf16.msra.mxu0 0
  %163 = vmatprep.subr.bf16.mxu0 0
  %164 = vmatpush2.bf16.msra.mxu0 0
  %165 = vmatprep.subr.bf16.mxu0 0
  %166 = vmatpush2.bf16.msra.mxu0 0
  %167 = vmatprep.subr.bf16.mxu0 0
  %168 = vmatpush2.bf16.msra.mxu0 0
  %169 = vmatprep.subr.bf16.mxu0 0
  %170 = vmatpush2.bf16.msra.mxu0 0
  %171 = vmatprep.subr.bf16.mxu0 0
  %172 = vmatpush2.bf16.msra.mxu0 0
  %173 = vmatprep.subr.bf16.mxu0 0
  %174 = vmatpush2.bf16.msra.mxu0 0
  %175 = vmatprep.mubr.bf16.mxu0 0
  %176 = vmatmul.mubr.bf16.gmra.mxu0 %v100
  %v177 = vpop.f32.mrf.mxu0
  %v178 = vadd.f32 %v49, %v177
  %v179 = vpop.f32.mrf.mxu0
  %v180 = vadd.f32 %v53, %v179
  %v181 = vpop.f32.mrf.mxu0
  %v182 = vpop.f32.mrf.mxu0
  %183 = vdwg.mxu0
  %v184 = vmax.f32 %v137, 0.0
  %v185 = vmax.f32 %v139, 0.0
  %v186 = vmax.f32 %v178, 0.0
  %v187 = vmax.f32 %v180, 0.0
  %v188 = vpack.c.bf16 %v184, %v184
  %v189 = vpack.c.bf16 %v185, %v185
  %v190 = vpack.c.bf16 %v186, %v186
  %v191 = vpack.c.bf16 %v187, %v187
  %v192 = vld [vmem:[%s3] sm:$0xff]
  %v193 = vld [vmem:[%s3 + $0x8] sm:$0xff]
  %v194 = vld [vmem:[%s3 + $0x10] sm:$0xff]
  %v195 = vld [vmem:[%s3 + $0x18] sm:$0xff]
  %v196 = vld [vmem:[%s3 + $0x20] sm:$0xff]
  %v197 = vld [vmem:[%s3 + $0x28] sm:$0xff]
  %v198 = vld [vmem:[%s3 + $0x30] sm:$0xff]
  %v199 = vld [vmem:[%s3 + $0x38] sm:$0xff]
  %v200 = vld [vmem:[%s3 + $0x40] sm:$0xff]
  %v201 = vld [vmem:[%s3 + $0x48] sm:$0xff]
  %v202 = vld [vmem:[%s3 + $0x50] sm:$0xff]
  %v203 = vld [vmem:[%s3 + $0x58] sm:$0xff]
  %v204 = vld [vmem:[%s3 + $0x60] sm:$0xff]
  %v205 = vld [vmem:[%s3 + $0x68] sm:$0xff]
  %v206 = vld [vmem:[%s3 + $0x70] sm:$0xff]
  %v207 = vld [vmem:[%s3 + $0x78] sm:$0xff]
  %v208 = vld [vmem:[%s3 + $0x80] sm:$0xff]
  %v209 = vld [vmem:[%s3 + $0x88] sm:$0xff]
  %v210 = vld [vmem:[%s3 + $0x90] sm:$0xff]
  %v211 = vld [vmem:[%s3 + $0x98] sm:$0xff]
  %v212 = vld [vmem:[%s3 + $0xa0] sm:$0xff]
  %v213 = vld [vmem:[%s3 + $0xa8] sm:$0xff]
  %v214 = vld [vmem:[%s3 + $0xb0] sm:$0xff]
  %v215 = vld [vmem:[%s3 + $0xb8] sm:$0xff]
  %v216 = vld [vmem:[%s3 + $0xc0] sm:$0xff]
  %v217 = vld [vmem:[%s3 + $0xc8] sm:$0xff]
  %v218 = vld [vmem:[%s3 + $0xd0] sm:$0xff]
  %v219 = vld [vmem:[%s3 + $0xd8] sm:$0xff]
  %v220 = vld [vmem:[%s3 + $0xe0] sm:$0xff]
  %v221 = vld [vmem:[%s3 + $0xe8] sm:$0xff]
  %v222 = vld [vmem:[%s3 + $0xf0] sm:$0xff]
  %v223 = vld [vmem:[%s3 + $0xf8] sm:$0xff]
  %v224 = vld [vmem:[%s3 + $0x100] sm:$0xff]
  %v225 = vld [vmem:[%s3 + $0x108] sm:$0xff]
  %v226 = vld [vmem:[%s3 + $0x110] sm:$0xff]
  %v227 = vld [vmem:[%s3 + $0x118] sm:$0xff]
  %v228 = vld [vmem:[%s3 + $0x120] sm:$0xff]
  %v229 = vld [vmem:[%s3 + $0x128] sm:$0xff]
  %v230 = vld [vmem:[%s3 + $0x130] sm:$0xff]
  %v231 = vld [vmem:[%s3 + $0x138] sm:$0xff]
  %v232 = vld [vmem:[%s3 + $0x140] sm:$0xff]
  %v233 = vld [vmem:[%s3 + $0x148] sm:$0xff]
  %v234 = vld [vmem:[%s3 + $0x150] sm:$0xff]
  %v235 = vld [vmem:[%s3 + $0x158] sm:$0xff]
  %v236 = vld [vmem:[%s3 + $0x160] sm:$0xff]
  %v237 = vld [vmem:[%s3 + $0x168] sm:$0xff]
  %v238 = vld [vmem:[%s3 + $0x170] sm:$0xff]
  %v239 = vld [vmem:[%s3 + $0x178] sm:$0xff]
  %v240 = vld [vmem:[%s3 + $0x180] sm:$0xff]
  %v241 = vld [vmem:[%s3 + $0x188] sm:$0xff]
  %v242 = vld [vmem:[%s3 + $0x190] sm:$0xff]
  %v243 = vld [vmem:[%s3 + $0x198] sm:$0xff]
  %v244 = vld [vmem:[%s3 + $0x1a0] sm:$0xff]
  %v245 = vld [vmem:[%s3 + $0x1a8] sm:$0xff]
  %v246 = vld [vmem:[%s3 + $0x1b0] sm:$0xff]
  %v247 = vld [vmem:[%s3 + $0x1b8] sm:$0xff]
  %v248 = vld [vmem:[%s3 + $0x1c0] sm:$0xff]
  %v249 = vld [vmem:[%s3 + $0x1c8] sm:$0xff]
  %v250 = vld [vmem:[%s3 + $0x1d0] sm:$0xff]
  %v251 = vld [vmem:[%s3 + $0x1d8] sm:$0xff]
  %v252 = vld [vmem:[%s3 + $0x1e0] sm:$0xff]
  %v253 = vld [vmem:[%s3 + $0x1e8] sm:$0xff]
  %v254 = vld [vmem:[%s3 + $0x1f0] sm:$0xff]
  %v255 = vld [vmem:[%s3 + $0x1f8] sm:$0xff]
  %v256 = vld [vmem:[%s3 + $0x200] sm:$0xff]
  %v257 = vld [vmem:[%s3 + $0x208] sm:$0xff]
  %v258 = vld [vmem:[%s3 + $0x210] sm:$0xff]
  %v259 = vld [vmem:[%s3 + $0x218] sm:$0xff]
  %v260 = vld [vmem:[%s3 + $0x220] sm:$0xff]
  %v261 = vld [vmem:[%s3 + $0x228] sm:$0xff]
  %v262 = vld [vmem:[%s3 + $0x230] sm:$0xff]
  %v263 = vld [vmem:[%s3 + $0x238] sm:$0xff]
  %v264 = vld [vmem:[%s3 + $0x240] sm:$0xff]
  %v265 = vld [vmem:[%s3 + $0x248] sm:$0xff]
  %v266 = vld [vmem:[%s3 + $0x250] sm:$0xff]
  %v267 = vld [vmem:[%s3 + $0x258] sm:$0xff]
  %v268 = vld [vmem:[%s3 + $0x260] sm:$0xff]
  %v269 = vld [vmem:[%s3 + $0x268] sm:$0xff]
  %v270 = vld [vmem:[%s3 + $0x270] sm:$0xff]
  %v271 = vld [vmem:[%s3 + $0x278] sm:$0xff]
  %v272 = vld [vmem:[%s3 + $0x280] sm:$0xff]
  %v273 = vld [vmem:[%s3 + $0x288] sm:$0xff]
  %v274 = vld [vmem:[%s3 + $0x290] sm:$0xff]
  %v275 = vld [vmem:[%s3 + $0x298] sm:$0xff]
  %v276 = vld [vmem:[%s3 + $0x2a0] sm:$0xff]
  %v277 = vld [vmem:[%s3 + $0x2a8] sm:$0xff]
  %v278 = vld [vmem:[%s3 + $0x2b0] sm:$0xff]
  %v279 = vld [vmem:[%s3 + $0x2b8] sm:$0xff]
  %v280 = vld [vmem:[%s3 + $0x2c0] sm:$0xff]
  %v281 = vld [vmem:[%s3 + $0x2c8] sm:$0xff]
  %v282 = vld [vmem:[%s3 + $0x2d0] sm:$0xff]
  %v283 = vld [vmem:[%s3 + $0x2d8] sm:$0xff]
  %v284 = vld [vmem:[%s3 + $0x2e0] sm:$0xff]
  %v285 = vld [vmem:[%s3 + $0x2e8] sm:$0xff]
  %v286 = vld [vmem:[%s3 + $0x2f0] sm:$0xff]
  %v287 = vld [vmem:[%s3 + $0x2f8] sm:$0xff]
  %v288 = vld [vmem:[%s3 + $0x300] sm:$0xff]
  %v289 = vld [vmem:[%s3 + $0x308] sm:$0xff]
  %v290 = vld [vmem:[%s3 + $0x310] sm:$0xff]
  %v291 = vld [vmem:[%s3 + $0x318] sm:$0xff]
  %v292 = vld [vmem:[%s3 + $0x320] sm:$0xff]
  %v293 = vld [vmem:[%s3 + $0x328] sm:$0xff]
  %v294 = vld [vmem:[%s3 + $0x330] sm:$0xff]
  %v295 = vld [vmem:[%s3 + $0x338] sm:$0xff]
  %v296 = vld [vmem:[%s3 + $0x340] sm:$0xff]
  %v297 = vld [vmem:[%s3 + $0x348] sm:$0xff]
  %v298 = vld [vmem:[%s3 + $0x350] sm:$0xff]
  %v299 = vld [vmem:[%s3 + $0x358] sm:$0xff]
  %v300 = vld [vmem:[%s3 + $0x360] sm:$0xff]
  %v301 = vld [vmem:[%s3 + $0x368] sm:$0xff]
  %v302 = vld [vmem:[%s3 + $0x370] sm:$0xff]
  %v303 = vld [vmem:[%s3 + $0x378] sm:$0xff]
  %v304 = vld [vmem:[%s3 + $0x380] sm:$0xff]
  %v305 = vld [vmem:[%s3 + $0x388] sm:$0xff]
  %v306 = vld [vmem:[%s3 + $0x390] sm:$0xff]
  %v307 = vld [vmem:[%s3 + $0x398] sm:$0xff]
  %v308 = vld [vmem:[%s3 + $0x3a0] sm:$0xff]
  %v309 = vld [vmem:[%s3 + $0x3a8] sm:$0xff]
  %v310 = vld [vmem:[%s3 + $0x3b0] sm:$0xff]
  %v311 = vld [vmem:[%s3 + $0x3b8] sm:$0xff]
  %v312 = vld [vmem:[%s3 + $0x3c0] sm:$0xff]
  %v313 = vld [vmem:[%s3 + $0x3c8] sm:$0xff]
  %v314 = vld [vmem:[%s3 + $0x3d0] sm:$0xff]
  %v315 = vld [vmem:[%s3 + $0x3d8] sm:$0xff]
  %v316 = vld [vmem:[%s3 + $0x3e0] sm:$0xff]
  %v317 = vld [vmem:[%s3 + $0x3e8] sm:$0xff]
  %v318 = vld [vmem:[%s3 + $0x3f0] sm:$0xff]
  %v319 = vld [vmem:[%s3 + $0x3f8] sm:$0xff]
  %v320 = vld [vmem:[%s4] sm:$0xf]
  %v322 = vlaneseq
  %v323 = vshrl.u32 %v322, 7
  %v324 = vsub.s32 0, %v323
  %v325 = vrot.slane %v320, %v324
  %v326 = vlaneseq
  %v327 = vshrl.u32 %v326, 7
  %v328 = vsub.s32 1, %v327
  %v329 = vrot.slane %v320, %v328
  %v330 = vlaneseq
  %v331 = vshrl.u32 %v330, 7
  %v332 = vsub.s32 2, %v331
  %v333 = vrot.slane %v320, %v332
  %v334 = vlaneseq
  %v335 = vshrl.u32 %v334, 7
  %v336 = vsub.s32 3, %v335
  %v337 = vrot.slane %v320, %v336
  %v470 = vunpack.c.l.b16 %v192
  %v471 = vunpack.c.h.b16 %v192
  %v472 = vunpack.c.l.b16 %v193
  %v473 = vunpack.c.h.b16 %v193
  %v474 = vunpack.c.l.b16 %v194
  %v475 = vunpack.c.h.b16 %v194
  %v476 = vunpack.c.l.b16 %v195
  %v477 = vunpack.c.h.b16 %v195
  %v478 = vunpack.c.l.b16 %v196
  %v479 = vunpack.c.h.b16 %v196
  %v480 = vunpack.c.l.b16 %v197
  %v481 = vunpack.c.h.b16 %v197
  %v482 = vunpack.c.l.b16 %v198
  %v483 = vunpack.c.h.b16 %v198
  %v484 = vunpack.c.l.b16 %v199
  %v485 = vunpack.c.h.b16 %v199
  %v486 = vunpack.c.l.b16 %v200
  %v487 = vunpack.c.h.b16 %v200
  %v488 = vunpack.c.l.b16 %v201
  %v489 = vunpack.c.h.b16 %v201
  %v490 = vunpack.c.l.b16 %v202
  %v491 = vunpack.c.h.b16 %v202
  %v492 = vunpack.c.l.b16 %v203
  %v493 = vunpack.c.h.b16 %v203
  %v494 = vunpack.c.l.b16 %v204
  %v495 = vunpack.c.h.b16 %v204
  %v496 = vunpack.c.l.b16 %v205
  %v497 = vunpack.c.h.b16 %v205
  %v498 = vunpack.c.l.b16 %v206
  %v499 = vunpack.c.h.b16 %v206
  %v500 = vunpack.c.l.b16 %v207
  %v501 = vunpack.c.h.b16 %v207
  %v502 = vunpack.c.l.b16 %v208
  %v503 = vunpack.c.h.b16 %v208
  %v504 = vunpack.c.l.b16 %v209
  %v505 = vunpack.c.h.b16 %v209
  %v506 = vunpack.c.l.b16 %v210
  %v507 = vunpack.c.h.b16 %v210
  %v508 = vunpack.c.l.b16 %v211
  %v509 = vunpack.c.h.b16 %v211
  %v510 = vunpack.c.l.b16 %v212
  %v511 = vunpack.c.h.b16 %v212
  %v512 = vunpack.c.l.b16 %v213
  %v513 = vunpack.c.h.b16 %v213
  %v514 = vunpack.c.l.b16 %v214
  %v515 = vunpack.c.h.b16 %v214
  %v516 = vunpack.c.l.b16 %v215
  %v517 = vunpack.c.h.b16 %v215
  %v518 = vunpack.c.l.b16 %v216
  %v519 = vunpack.c.h.b16 %v216
  %v520 = vunpack.c.l.b16 %v217
  %v521 = vunpack.c.h.b16 %v217
  %v522 = vunpack.c.l.b16 %v218
  %v523 = vunpack.c.h.b16 %v218
  %v524 = vunpack.c.l.b16 %v219
  %v525 = vunpack.c.h.b16 %v219
  %v526 = vunpack.c.l.b16 %v220
  %v527 = vunpack.c.h.b16 %v220
  %v528 = vunpack.c.l.b16 %v221
  %v529 = vunpack.c.h.b16 %v221
  %v530 = vunpack.c.l.b16 %v222
  %v531 = vunpack.c.h.b16 %v222
  %v532 = vunpack.c.l.b16 %v223
  %v533 = vunpack.c.h.b16 %v223
  %v534 = vunpack.c.l.b16 %v224
  %v535 = vunpack.c.h.b16 %v224
  %v536 = vunpack.c.l.b16 %v225
  %v537 = vunpack.c.h.b16 %v225
  %v538 = vunpack.c.l.b16 %v226
  %v539 = vunpack.c.h.b16 %v226
  %v540 = vunpack.c.l.b16 %v227
  %v541 = vunpack.c.h.b16 %v227
  %v542 = vunpack.c.l.b16 %v228
  %v543 = vunpack.c.h.b16 %v228
  %v544 = vunpack.c.l.b16 %v229
  %v545 = vunpack.c.h.b16 %v229
  %v546 = vunpack.c.l.b16 %v230
  %v547 = vunpack.c.h.b16 %v230
  %v548 = vunpack.c.l.b16 %v231
  %v549 = vunpack.c.h.b16 %v231
  %v550 = vunpack.c.l.b16 %v232
  %v551 = vunpack.c.h.b16 %v232
  %v552 = vunpack.c.l.b16 %v233
  %v553 = vunpack.c.h.b16 %v233
  %v554 = vunpack.c.l.b16 %v234
  %v555 = vunpack.c.h.b16 %v234
  %v556 = vunpack.c.l.b16 %v235
  %v557 = vunpack.c.h.b16 %v235
  %v558 = vunpack.c.l.b16 %v236
  %v559 = vunpack.c.h.b16 %v236
  %v560 = vunpack.c.l.b16 %v237
  %v561 = vunpack.c.h.b16 %v237
  %v562 = vunpack.c.l.b16 %v238
  %v563 = vunpack.c.h.b16 %v238
  %v564 = vunpack.c.l.b16 %v239
  %v565 = vunpack.c.h.b16 %v239
  %v566 = vunpack.c.l.b16 %v240
  %v567 = vunpack.c.h.b16 %v240
  %v568 = vunpack.c.l.b16 %v241
  %v569 = vunpack.c.h.b16 %v241
  %v570 = vunpack.c.l.b16 %v242
  %v571 = vunpack.c.h.b16 %v242
  %v572 = vunpack.c.l.b16 %v243
  %v573 = vunpack.c.h.b16 %v243
  %v574 = vunpack.c.l.b16 %v244
  %v575 = vunpack.c.h.b16 %v244
  %v576 = vunpack.c.l.b16 %v245
  %v577 = vunpack.c.h.b16 %v245
  %v578 = vunpack.c.l.b16 %v246
  %v579 = vunpack.c.h.b16 %v246
  %v580 = vunpack.c.l.b16 %v247
  %v581 = vunpack.c.h.b16 %v247
  %v582 = vunpack.c.l.b16 %v248
  %v583 = vunpack.c.h.b16 %v248
  %v584 = vunpack.c.l.b16 %v249
  %v585 = vunpack.c.h.b16 %v249
  %v586 = vunpack.c.l.b16 %v250
  %v587 = vunpack.c.h.b16 %v250
  %v588 = vunpack.c.l.b16 %v251
  %v589 = vunpack.c.h.b16 %v251
  %v590 = vunpack.c.l.b16 %v252
  %v591 = vunpack.c.h.b16 %v252
  %v592 = vunpack.c.l.b16 %v253
  %v593 = vunpack.c.h.b16 %v253
  %v594 = vunpack.c.l.b16 %v254
  %v595 = vunpack.c.h.b16 %v254
  %v596 = vunpack.c.l.b16 %v255
  %v597 = vunpack.c.h.b16 %v255
  %v598 = vunpack.c.l.b16 %v256
  %v599 = vunpack.c.h.b16 %v256
  %v600 = vunpack.c.l.b16 %v257
  %v601 = vunpack.c.h.b16 %v257
  %v602 = vunpack.c.l.b16 %v258
  %v603 = vunpack.c.h.b16 %v258
  %v604 = vunpack.c.l.b16 %v259
  %v605 = vunpack.c.h.b16 %v259
  %v606 = vunpack.c.l.b16 %v260
  %v607 = vunpack.c.h.b16 %v260
  %v608 = vunpack.c.l.b16 %v261
  %v609 = vunpack.c.h.b16 %v261
  %v610 = vunpack.c.l.b16 %v262
  %v611 = vunpack.c.h.b16 %v262
  %v612 = vunpack.c.l.b16 %v263
  %v613 = vunpack.c.h.b16 %v263
  %v614 = vunpack.c.l.b16 %v264
  %v615 = vunpack.c.h.b16 %v264
  %v616 = vunpack.c.l.b16 %v265
  %v617 = vunpack.c.h.b16 %v265
  %v618 = vunpack.c.l.b16 %v266
  %v619 = vunpack.c.h.b16 %v266
  %v620 = vunpack.c.l.b16 %v267
  %v621 = vunpack.c.h.b16 %v267
  %v622 = vunpack.c.l.b16 %v268
  %v623 = vunpack.c.h.b16 %v268
  %v624 = vunpack.c.l.b16 %v269
  %v625 = vunpack.c.h.b16 %v269
  %v626 = vunpack.c.l.b16 %v270
  %v627 = vunpack.c.h.b16 %v270
  %v628 = vunpack.c.l.b16 %v271
  %v629 = vunpack.c.h.b16 %v271
  %v630 = vunpack.c.l.b16 %v272
  %v631 = vunpack.c.h.b16 %v272
  %v632 = vunpack.c.l.b16 %v273
  %v633 = vunpack.c.h.b16 %v273
  %v634 = vunpack.c.l.b16 %v274
  %v635 = vunpack.c.h.b16 %v274
  %v636 = vunpack.c.l.b16 %v275
  %v637 = vunpack.c.h.b16 %v275
  %v638 = vunpack.c.l.b16 %v276
  %v639 = vunpack.c.h.b16 %v276
  %v640 = vunpack.c.l.b16 %v277
  %v641 = vunpack.c.h.b16 %v277
  %v642 = vunpack.c.l.b16 %v278
  %v643 = vunpack.c.h.b16 %v278
  %v644 = vunpack.c.l.b16 %v279
  %v645 = vunpack.c.h.b16 %v279
  %v646 = vunpack.c.l.b16 %v280
  %v647 = vunpack.c.h.b16 %v280
  %v648 = vunpack.c.l.b16 %v281
  %v649 = vunpack.c.h.b16 %v281
  %v650 = vunpack.c.l.b16 %v282
  %v651 = vunpack.c.h.b16 %v282
  %v652 = vunpack.c.l.b16 %v283
  %v653 = vunpack.c.h.b16 %v283
  %v654 = vunpack.c.l.b16 %v284
  %v655 = vunpack.c.h.b16 %v284
  %v656 = vunpack.c.l.b16 %v285
  %v657 = vunpack.c.h.b16 %v285
  %v658 = vunpack.c.l.b16 %v286
  %v659 = vunpack.c.h.b16 %v286
  %v660 = vunpack.c.l.b16 %v287
  %v661 = vunpack.c.h.b16 %v287
  %v662 = vunpack.c.l.b16 %v288
  %v663 = vunpack.c.h.b16 %v288
  %v664 = vunpack.c.l.b16 %v289
  %v665 = vunpack.c.h.b16 %v289
  %v666 = vunpack.c.l.b16 %v290
  %v667 = vunpack.c.h.b16 %v290
  %v668 = vunpack.c.l.b16 %v291
  %v669 = vunpack.c.h.b16 %v291
  %v670 = vunpack.c.l.b16 %v292
  %v671 = vunpack.c.h.b16 %v292
  %v672 = vunpack.c.l.b16 %v293
  %v673 = vunpack.c.h.b16 %v293
  %v674 = vunpack.c.l.b16 %v294
  %v675 = vunpack.c.h.b16 %v294
  %v676 = vunpack.c.l.b16 %v295
  %v677 = vunpack.c.h.b16 %v295
  %v678 = vunpack.c.l.b16 %v296
  %v679 = vunpack.c.h.b16 %v296
  %v680 = vunpack.c.l.b16 %v297
  %v681 = vunpack.c.h.b16 %v297
  %v682 = vunpack.c.l.b16 %v298
  %v683 = vunpack.c.h.b16 %v298
  %v684 = vunpack.c.l.b16 %v299
  %v685 = vunpack.c.h.b16 %v299
  %v686 = vunpack.c.l.b16 %v300
  %v687 = vunpack.c.h.b16 %v300
  %v688 = vunpack.c.l.b16 %v301
  %v689 = vunpack.c.h.b16 %v301
  %v690 = vunpack.c.l.b16 %v302
  %v691 = vunpack.c.h.b16 %v302
  %v692 = vunpack.c.l.b16 %v303
  %v693 = vunpack.c.h.b16 %v303
  %v694 = vunpack.c.l.b16 %v304
  %v695 = vunpack.c.h.b16 %v304
  %v696 = vunpack.c.l.b16 %v305
  %v697 = vunpack.c.h.b16 %v305
  %v698 = vunpack.c.l.b16 %v306
  %v699 = vunpack.c.h.b16 %v306
  %v700 = vunpack.c.l.b16 %v307
  %v701 = vunpack.c.h.b16 %v307
  %v702 = vunpack.c.l.b16 %v308
  %v703 = vunpack.c.h.b16 %v308
  %v704 = vunpack.c.l.b16 %v309
  %v705 = vunpack.c.h.b16 %v309
  %v706 = vunpack.c.l.b16 %v310
  %v707 = vunpack.c.h.b16 %v310
  %v708 = vunpack.c.l.b16 %v311
  %v709 = vunpack.c.h.b16 %v311
  %v710 = vunpack.c.l.b16 %v312
  %v711 = vunpack.c.h.b16 %v312
  %v712 = vunpack.c.l.b16 %v313
  %v713 = vunpack.c.h.b16 %v313
  %v714 = vunpack.c.l.b16 %v314
  %v715 = vunpack.c.h.b16 %v314
  %v716 = vunpack.c.l.b16 %v315
  %v717 = vunpack.c.h.b16 %v315
  %v718 = vunpack.c.l.b16 %v316
  %v719 = vunpack.c.h.b16 %v316
  %v720 = vunpack.c.l.b16 %v317
  %v721 = vunpack.c.h.b16 %v317
  %v722 = vunpack.c.l.b16 %v318
  %v723 = vunpack.c.h.b16 %v318
  %v724 = vunpack.c.l.b16 %v319
  %v725 = vunpack.c.h.b16 %v319
  %v726 = vpack.c.b16 %v474, %v470
  %v727 = vpack.c.b16 %v475, %v471
  %v728 = vpack.c.b16 %v476, %v472
  %v729 = vpack.c.b16 %v477, %v473
  %v730 = vpack.c.b16 %v482, %v478
  %v731 = vpack.c.b16 %v483, %v479
  %v732 = vpack.c.b16 %v484, %v480
  %v733 = vpack.c.b16 %v485, %v481
  %v734 = vpack.c.b16 %v490, %v486
  %v735 = vpack.c.b16 %v491, %v487
  %v736 = vpack.c.b16 %v492, %v488
  %v737 = vpack.c.b16 %v493, %v489
  %v738 = vpack.c.b16 %v498, %v494
  %v739 = vpack.c.b16 %v499, %v495
  %v740 = vpack.c.b16 %v500, %v496
  %v741 = vpack.c.b16 %v501, %v497
  %v742 = vpack.c.b16 %v506, %v502
  %v743 = vpack.c.b16 %v507, %v503
  %v744 = vpack.c.b16 %v508, %v504
  %v745 = vpack.c.b16 %v509, %v505
  %v746 = vpack.c.b16 %v514, %v510
  %v747 = vpack.c.b16 %v515, %v511
  %v748 = vpack.c.b16 %v516, %v512
  %v749 = vpack.c.b16 %v517, %v513
  %v750 = vpack.c.b16 %v522, %v518
  %v751 = vpack.c.b16 %v523, %v519
  %v752 = vpack.c.b16 %v524, %v520
  %v753 = vpack.c.b16 %v525, %v521
  %v754 = vpack.c.b16 %v530, %v526
  %v755 = vpack.c.b16 %v531, %v527
  %v756 = vpack.c.b16 %v532, %v528
  %v757 = vpack.c.b16 %v533, %v529
  %v758 = vpack.c.b16 %v538, %v534
  %v759 = vpack.c.b16 %v539, %v535
  %v760 = vpack.c.b16 %v540, %v536
  %v761 = vpack.c.b16 %v541, %v537
  %v762 = vpack.c.b16 %v546, %v542
  %v763 = vpack.c.b16 %v547, %v543
  %v764 = vpack.c.b16 %v548, %v544
  %v765 = vpack.c.b16 %v549, %v545
  %v766 = vpack.c.b16 %v554, %v550
  %v767 = vpack.c.b16 %v555, %v551
  %v768 = vpack.c.b16 %v556, %v552
  %v769 = vpack.c.b16 %v557, %v553
  %v770 = vpack.c.b16 %v562, %v558
  %v771 = vpack.c.b16 %v563, %v559
  %v772 = vpack.c.b16 %v564, %v560
  %v773 = vpack.c.b16 %v565, %v561
  %v774 = vpack.c.b16 %v570, %v566
  %v775 = vpack.c.b16 %v571, %v567
  %v776 = vpack.c.b16 %v572, %v568
  %v777 = vpack.c.b16 %v573, %v569
  %v778 = vpack.c.b16 %v578, %v574
  %v779 = vpack.c.b16 %v579, %v575
  %v780 = vpack.c.b16 %v580, %v576
  %v781 = vpack.c.b16 %v581, %v577
  %v782 = vpack.c.b16 %v586, %v582
  %v783 = vpack.c.b16 %v587, %v583
  %v784 = vpack.c.b16 %v588, %v584
  %v785 = vpack.c.b16 %v589, %v585
  %v786 = vpack.c.b16 %v594, %v590
  %v787 = vpack.c.b16 %v595, %v591
  %v788 = vpack.c.b16 %v596, %v592
  %v789 = vpack.c.b16 %v597, %v593
  %v790 = vpack.c.b16 %v602, %v598
  %v791 = vpack.c.b16 %v603, %v599
  %v792 = vpack.c.b16 %v604, %v600
  %v793 = vpack.c.b16 %v605, %v601
  %v794 = vpack.c.b16 %v610, %v606
  %v795 = vpack.c.b16 %v611, %v607
  %v796 = vpack.c.b16 %v612, %v608
  %v797 = vpack.c.b16 %v613, %v609
  %v798 = vpack.c.b16 %v618, %v614
  %v799 = vpack.c.b16 %v619, %v615
  %v800 = vpack.c.b16 %v620, %v616
  %v801 = vpack.c.b16 %v621, %v617
  %v802 = vpack.c.b16 %v626, %v622
  %v803 = vpack.c.b16 %v627, %v623
  %v804 = vpack.c.b16 %v628, %v624
  %v805 = vpack.c.b16 %v629, %v625
  %v806 = vpack.c.b16 %v634, %v630
  %v807 = vpack.c.b16 %v635, %v631
  %v808 = vpack.c.b16 %v636, %v632
  %v809 = vpack.c.b16 %v637, %v633
  %v810 = vpack.c.b16 %v642, %v638
  %v811 = vpack.c.b16 %v643, %v639
  %v812 = vpack.c.b16 %v644, %v640
  %v813 = vpack.c.b16 %v645, %v641
  %v814 = vpack.c.b16 %v650, %v646
  %v815 = vpack.c.b16 %v651, %v647
  %v816 = vpack.c.b16 %v652, %v648
  %v817 = vpack.c.b16 %v653, %v649
  %v818 = vpack.c.b16 %v658, %v654
  %v819 = vpack.c.b16 %v659, %v655
  %v820 = vpack.c.b16 %v660, %v656
  %v821 = vpack.c.b16 %v661, %v657
  %v822 = vpack.c.b16 %v666, %v662
  %v823 = vpack.c.b16 %v667, %v663
  %v824 = vpack.c.b16 %v668, %v664
  %v825 = vpack.c.b16 %v669, %v665
  %v826 = vpack.c.b16 %v674, %v670
  %v827 = vpack.c.b16 %v675, %v671
  %v828 = vpack.c.b16 %v676, %v672
  %v829 = vpack.c.b16 %v677, %v673
  %v830 = vpack.c.b16 %v682, %v678
  %v831 = vpack.c.b16 %v683, %v679
  %v832 = vpack.c.b16 %v684, %v680
  %v833 = vpack.c.b16 %v685, %v681
  %v834 = vpack.c.b16 %v690, %v686
  %v835 = vpack.c.b16 %v691, %v687
  %v836 = vpack.c.b16 %v692, %v688
  %v837 = vpack.c.b16 %v693, %v689
  %v838 = vpack.c.b16 %v698, %v694
  %v839 = vpack.c.b16 %v699, %v695
  %v840 = vpack.c.b16 %v700, %v696
  %v841 = vpack.c.b16 %v701, %v697
  %v842 = vpack.c.b16 %v706, %v702
  %v843 = vpack.c.b16 %v707, %v703
  %v844 = vpack.c.b16 %v708, %v704
  %v845 = vpack.c.b16 %v709, %v705
  %v846 = vpack.c.b16 %v714, %v710
  %v847 = vpack.c.b16 %v715, %v711
  %v848 = vpack.c.b16 %v716, %v712
  %v849 = vpack.c.b16 %v717, %v713
  %v850 = vpack.c.b16 %v722, %v718
  %v851 = vpack.c.b16 %v723, %v719
  %v852 = vpack.c.b16 %v724, %v720
  %v853 = vpack.c.b16 %v725, %v721
  %982 = vmatprep.subr.bf16.mxu0 %v755
  %983 = vmatpush1.bf16.msra.mxu0 %v754
  %984 = vmatprep.subr.bf16.mxu0 %v751
  %985 = vmatpush1.bf16.msra.mxu0 %v750
  %986 = vmatprep.subr.bf16.mxu0 %v747
  %987 = vmatpush1.bf16.msra.mxu0 %v746
  %988 = vmatprep.subr.bf16.mxu0 %v743
  %989 = vmatpush1.bf16.msra.mxu0 %v742
  %990 = vmatprep.subr.bf16.mxu0 %v739
  %991 = vmatpush1.bf16.msra.mxu0 %v738
  %992 = vmatprep.subr.bf16.mxu0 %v735
  %993 = vmatpush1.bf16.msra.mxu0 %v734
  %994 = vmatprep.subr.bf16.mxu0 %v731
  %995 = vmatpush1.bf16.msra.mxu0 %v730
  %996 = vmatprep.subr.bf16.mxu0 %v727
  %997 = vmatpush1.bf16.msra.mxu0 %v726
  %998 = vmatprep.subr.bf16.mxu0 %v787
  %999 = vmatpush2.bf16.msra.mxu0 %v786
  %1000 = vmatprep.subr.bf16.mxu0 %v783
  %1001 = vmatpush2.bf16.msra.mxu0 %v782
  %1002 = vmatprep.subr.bf16.mxu0 %v779
  %1003 = vmatpush2.bf16.msra.mxu0 %v778
  %1004 = vmatprep.subr.bf16.mxu0 %v775
  %1005 = vmatpush2.bf16.msra.mxu0 %v774
  %1006 = vmatprep.subr.bf16.mxu0 %v771
  %1007 = vmatpush2.bf16.msra.mxu0 %v770
  %1008 = vmatprep.subr.bf16.mxu0 %v767
  %1009 = vmatpush2.bf16.msra.mxu0 %v766
  %1010 = vmatprep.subr.bf16.mxu0 %v763
  %1011 = vmatpush2.bf16.msra.mxu0 %v762
  %1012 = vmatprep.subr.bf16.mxu0 %v759
  %1013 = vmatpush2.bf16.msra.mxu0 %v758
  %1014 = vmatprep.mubr.bf16.mxu0 %v189
  %1015 = vmatmul.mubr.bf16.gmra.mxu0 %v188
  %v1016 = vpop.f32.mrf.mxu0
  %v1017 = vadd.f32 %v325, %v1016
  %v1018 = vpop.f32.mrf.mxu0
  %v1019 = vadd.f32 %v329, %v1018
  %v1020 = vpop.f32.mrf.mxu0
  %v1021 = vpop.f32.mrf.mxu0
  %1022 = vdwg.mxu0
  %1023 = vmatprep.subr.bf16.mxu0 %v819
  %1024 = vmatpush1.bf16.msra.mxu0 %v818
  %1025 = vmatprep.subr.bf16.mxu0 %v815
  %1026 = vmatpush1.bf16.msra.mxu0 %v814
  %1027 = vmatprep.subr.bf16.mxu0 %v811
  %1028 = vmatpush1.bf16.msra.mxu0 %v810
  %1029 = vmatprep.subr.bf16.mxu0 %v807
  %1030 = vmatpush1.bf16.msra.mxu0 %v806
  %1031 = vmatprep.subr.bf16.mxu0 %v803
  %1032 = vmatpush1.bf16.msra.mxu0 %v802
  %1033 = vmatprep.subr.bf16.mxu0 %v799
  %1034 = vmatpush1.bf16.msra.mxu0 %v798
  %1035 = vmatprep.subr.bf16.mxu0 %v795
  %1036 = vmatpush1.bf16.msra.mxu0 %v794
  %1037 = vmatprep.subr.bf16.mxu0 %v791
  %1038 = vmatpush1.bf16.msra.mxu0 %v790
  %1039 = vmatprep.subr.bf16.mxu0 %v851
  %1040 = vmatpush2.bf16.msra.mxu0 %v850
  %1041 = vmatprep.subr.bf16.mxu0 %v847
  %1042 = vmatpush2.bf16.msra.mxu0 %v846
  %1043 = vmatprep.subr.bf16.mxu0 %v843
  %1044 = vmatpush2.bf16.msra.mxu0 %v842
  %1045 = vmatprep.subr.bf16.mxu0 %v839
  %1046 = vmatpush2.bf16.msra.mxu0 %v838
  %1047 = vmatprep.subr.bf16.mxu0 %v835
  %1048 = vmatpush2.bf16.msra.mxu0 %v834
  %1049 = vmatprep.subr.bf16.mxu0 %v831
  %1050 = vmatpush2.bf16.msra.mxu0 %v830
  %1051 = vmatprep.subr.bf16.mxu0 %v827
  %1052 = vmatpush2.bf16.msra.mxu0 %v826
  %1053 = vmatprep.subr.bf16.mxu0 %v823
  %1054 = vmatpush2.bf16.msra.mxu0 %v822
  %1055 = vmatprep.mubr.bf16.mxu0 %v191
  %1056 = vmatmul.mubr.bf16.gmra.mxu0 %v190
  %v1057 = vpop.f32.mrf.mxu0
  %v1058 = vadd.f32 %v1017, %v1057
  %v1059 = vpop.f32.mrf.mxu0
  %v1060 = vadd.f32 %v1019, %v1059
  %v1061 = vpop.f32.mrf.mxu0
  %v1062 = vpop.f32.mrf.mxu0
  %1063 = vdwg.mxu0
  %1064 = vmatprep.subr.bf16.mxu0 %v757
  %1065 = vmatpush1.bf16.msra.mxu0 %v756
  %1066 = vmatprep.subr.bf16.mxu0 %v753
  %1067 = vmatpush1.bf16.msra.mxu0 %v752
  %1068 = vmatprep.subr.bf16.mxu0 %v749
  %1069 = vmatpush1.bf16.msra.mxu0 %v748
  %1070 = vmatprep.subr.bf16.mxu0 %v745
  %1071 = vmatpush1.bf16.msra.mxu0 %v744
  %1072 = vmatprep.subr.bf16.mxu0 %v741
  %1073 = vmatpush1.bf16.msra.mxu0 %v740
  %1074 = vmatprep.subr.bf16.mxu0 %v737
  %1075 = vmatpush1.bf16.msra.mxu0 %v736
  %1076 = vmatprep.subr.bf16.mxu0 %v733
  %1077 = vmatpush1.bf16.msra.mxu0 %v732
  %1078 = vmatprep.subr.bf16.mxu0 %v729
  %1079 = vmatpush1.bf16.msra.mxu0 %v728
  %1080 = vmatprep.subr.bf16.mxu0 %v789
  %1081 = vmatpush2.bf16.msra.mxu0 %v788
  %1082 = vmatprep.subr.bf16.mxu0 %v785
  %1083 = vmatpush2.bf16.msra.mxu0 %v784
  %1084 = vmatprep.subr.bf16.mxu0 %v781
  %1085 = vmatpush2.bf16.msra.mxu0 %v780
  %1086 = vmatprep.subr.bf16.mxu0 %v777
  %1087 = vmatpush2.bf16.msra.mxu0 %v776
  %1088 = vmatprep.subr.bf16.mxu0 %v773
  %1089 = vmatpush2.bf16.msra.mxu0 %v772
  %1090 = vmatprep.subr.bf16.mxu0 %v769
  %1091 = vmatpush2.bf16.msra.mxu0 %v768
  %1092 = vmatprep.subr.bf16.mxu0 %v765
  %1093 = vmatpush2.bf16.msra.mxu0 %v764
  %1094 = vmatprep.subr.bf16.mxu0 %v761
  %1095 = vmatpush2.bf16.msra.mxu0 %v760
  %1096 = vmatprep.mubr.bf16.mxu0 %v189
  %1097 = vmatmul.mubr.bf16.gmra.mxu0 %v188
  %v1098 = vpop.f32.mrf.mxu0
  %v1099 = vadd.f32 %v333, %v1098
  %v1100 = vpop.f32.mrf.mxu0
  %v1101 = vadd.f32 %v337, %v1100
  %v1102 = vpop.f32.mrf.mxu0
  %v1103 = vpop.f32.mrf.mxu0
  %1104 = vdwg.mxu0
  %1105 = vmatprep.subr.bf16.mxu0 %v821
  %1106 = vmatpush1.bf16.msra.mxu0 %v820
  %1107 = vmatprep.subr.bf16.mxu0 %v817
  %1108 = vmatpush1.bf16.msra.mxu0 %v816
  %1109 = vmatprep.subr.bf16.mxu0 %v813
  %1110 = vmatpush1.bf16.msra.mxu0 %v812
  %1111 = vmatprep.subr.bf16.mxu0 %v809
  %1112 = vmatpush1.bf16.msra.mxu0 %v808
  %1113 = vmatprep.subr.bf16.mxu0 %v805
  %1114 = vmatpush1.bf16.msra.mxu0 %v804
  %1115 = vmatprep.subr.bf16.mxu0 %v801
  %1116 = vmatpush1.bf16.msra.mxu0 %v800
  %1117 = vmatprep.subr.bf16.mxu0 %v797
  %1118 = vmatpush1.bf16.msra.mxu0 %v796
  %1119 = vmatprep.subr.bf16.mxu0 %v793
  %1120 = vmatpush1.bf16.msra.mxu0 %v792
  %1121 = vmatprep.subr.bf16.mxu0 %v853
  %1122 = vmatpush2.bf16.msra.mxu0 %v852
  %1123 = vmatprep.subr.bf16.mxu0 %v849
  %1124 = vmatpush2.bf16.msra.mxu0 %v848
  %1125 = vmatprep.subr.bf16.mxu0 %v845
  %1126 = vmatpush2.bf16.msra.mxu0 %v844
  %1127 = vmatprep.subr.bf16.mxu0 %v841
  %1128 = vmatpush2.bf16.msra.mxu0 %v840
  %1129 = vmatprep.subr.bf16.mxu0 %v837
  %1130 = vmatpush2.bf16.msra.mxu0 %v836
  %1131 = vmatprep.subr.bf16.mxu0 %v833
  %1132 = vmatpush2.bf16.msra.mxu0 %v832
  %1133 = vmatprep.subr.bf16.mxu0 %v829
  %1134 = vmatpush2.bf16.msra.mxu0 %v828
  %1135 = vmatprep.subr.bf16.mxu0 %v825
  %1136 = vmatpush2.bf16.msra.mxu0 %v824
  %1137 = vmatprep.mubr.bf16.mxu0 %v191
  %1138 = vmatmul.mubr.bf16.gmra.mxu0 %v190
  %v1139 = vpop.f32.mrf.mxu0
  %v1140 = vadd.f32 %v1099, %v1139
  %v1141 = vpop.f32.mrf.mxu0
  %v1142 = vadd.f32 %v1101, %v1141
  %v1143 = vpop.f32.mrf.mxu0
  %v1144 = vpop.f32.mrf.mxu0
  %1145 = vdwg.mxu0
  %v1146 = vmax.f32 %v1058, 0.0
  %v1147 = vmax.f32 %v1060, 0.0
  %v1148 = vmax.f32 %v1140, 0.0
  %v1149 = vmax.f32 %v1142, 0.0
  %v1150 = vpack.c.bf16 %v1146, %v1146
  %v1151 = vpack.c.bf16 %v1147, %v1147
  %v1152 = vpack.c.bf16 %v1148, %v1148
  %v1153 = vpack.c.bf16 %v1149, %v1149
  %v1154 = vld [vmem:[%s5] sm:$0xf]
  %v1155 = vld [vmem:[%s5 + $0x4] sm:$0xf]
  %v1156 = vld [vmem:[%s5 + $0x8] sm:$0xf]
  %v1157 = vld [vmem:[%s5 + $0xc] sm:$0xf]
  %v1158 = vld [vmem:[%s5 + $0x10] sm:$0xf]
  %v1159 = vld [vmem:[%s5 + $0x14] sm:$0xf]
  %v1160 = vld [vmem:[%s5 + $0x18] sm:$0xf]
  %v1161 = vld [vmem:[%s5 + $0x1c] sm:$0xf]
  %v1162 = vld [vmem:[%s5 + $0x20] sm:$0xf]
  %v1163 = vld [vmem:[%s5 + $0x24] sm:$0xf]
  %v1164 = vld [vmem:[%s5 + $0x28] sm:$0xf]
  %v1165 = vld [vmem:[%s5 + $0x2c] sm:$0xf]
  %v1166 = vld [vmem:[%s5 + $0x30] sm:$0xf]
  %v1167 = vld [vmem:[%s5 + $0x34] sm:$0xf]
  %v1168 = vld [vmem:[%s5 + $0x38] sm:$0xf]
  %v1169 = vld [vmem:[%s5 + $0x3c] sm:$0xf]
  %v1170 = vld [vmem:[%s5 + $0x40] sm:$0xf]
  %v1171 = vld [vmem:[%s5 + $0x44] sm:$0xf]
  %v1172 = vld [vmem:[%s5 + $0x48] sm:$0xf]
  %v1173 = vld [vmem:[%s5 + $0x4c] sm:$0xf]
  %v1174 = vld [vmem:[%s5 + $0x50] sm:$0xf]
  %v1175 = vld [vmem:[%s5 + $0x54] sm:$0xf]
  %v1176 = vld [vmem:[%s5 + $0x58] sm:$0xf]
  %v1177 = vld [vmem:[%s5 + $0x5c] sm:$0xf]
  %v1178 = vld [vmem:[%s5 + $0x60] sm:$0xf]
  %v1179 = vld [vmem:[%s5 + $0x64] sm:$0xf]
  %v1180 = vld [vmem:[%s5 + $0x68] sm:$0xf]
  %v1181 = vld [vmem:[%s5 + $0x6c] sm:$0xf]
  %v1182 = vld [vmem:[%s5 + $0x70] sm:$0xf]
  %v1183 = vld [vmem:[%s5 + $0x74] sm:$0xf]
  %v1184 = vld [vmem:[%s5 + $0x78] sm:$0xf]
  %v1185 = vld [vmem:[%s5 + $0x7c] sm:$0xf]
  %v1186 = vld [vmem:[%s5 + $0x80] sm:$0xf]
  %v1187 = vld [vmem:[%s5 + $0x84] sm:$0xf]
  %v1188 = vld [vmem:[%s5 + $0x88] sm:$0xf]
  %v1189 = vld [vmem:[%s5 + $0x8c] sm:$0xf]
  %v1190 = vld [vmem:[%s5 + $0x90] sm:$0xf]
  %v1191 = vld [vmem:[%s5 + $0x94] sm:$0xf]
  %v1192 = vld [vmem:[%s5 + $0x98] sm:$0xf]
  %v1193 = vld [vmem:[%s5 + $0x9c] sm:$0xf]
  %v1194 = vld [vmem:[%s5 + $0xa0] sm:$0xf]
  %v1195 = vld [vmem:[%s5 + $0xa4] sm:$0xf]
  %v1196 = vld [vmem:[%s5 + $0xa8] sm:$0xf]
  %v1197 = vld [vmem:[%s5 + $0xac] sm:$0xf]
  %v1198 = vld [vmem:[%s5 + $0xb0] sm:$0xf]
  %v1199 = vld [vmem:[%s5 + $0xb4] sm:$0xf]
  %v1200 = vld [vmem:[%s5 + $0xb8] sm:$0xf]
  %v1201 = vld [vmem:[%s5 + $0xbc] sm:$0xf]
  %v1202 = vld [vmem:[%s5 + $0xc0] sm:$0xf]
  %v1203 = vld [vmem:[%s5 + $0xc4] sm:$0xf]
  %v1204 = vld [vmem:[%s5 + $0xc8] sm:$0xf]
  %v1205 = vld [vmem:[%s5 + $0xcc] sm:$0xf]
  %v1206 = vld [vmem:[%s5 + $0xd0] sm:$0xf]
  %v1207 = vld [vmem:[%s5 + $0xd4] sm:$0xf]
  %v1208 = vld [vmem:[%s5 + $0xd8] sm:$0xf]
  %v1209 = vld [vmem:[%s5 + $0xdc] sm:$0xf]
  %v1210 = vld [vmem:[%s5 + $0xe0] sm:$0xf]
  %v1211 = vld [vmem:[%s5 + $0xe4] sm:$0xf]
  %v1212 = vld [vmem:[%s5 + $0xe8] sm:$0xf]
  %v1213 = vld [vmem:[%s5 + $0xec] sm:$0xf]
  %v1214 = vld [vmem:[%s5 + $0xf0] sm:$0xf]
  %v1215 = vld [vmem:[%s5 + $0xf4] sm:$0xf]
  %v1216 = vld [vmem:[%s5 + $0xf8] sm:$0xf]
  %v1217 = vld [vmem:[%s5 + $0xfc] sm:$0xf]
  %v1218 = vld [vmem:[%s6] sm:$0x1]
  %v1220 = vlaneseq
  %v1221 = vshrl.u32 %v1220, 7
  %v1222 = vsub.s32 0, %v1221
  %v1223 = vrot.slane %v1218, %v1222
  %v1289 = vunpack.c.l.b16 %v1154
  %v1290 = vunpack.c.l.b16 %v1155
  %v1291 = vunpack.c.l.b16 %v1156
  %v1292 = vunpack.c.l.b16 %v1157
  %v1293 = vunpack.c.l.b16 %v1158
  %v1294 = vunpack.c.l.b16 %v1159
  %v1295 = vunpack.c.l.b16 %v1160
  %v1296 = vunpack.c.l.b16 %v1161
  %v1297 = vunpack.c.l.b16 %v1162
  %v1298 = vunpack.c.l.b16 %v1163
  %v1299 = vunpack.c.l.b16 %v1164
  %v1300 = vunpack.c.l.b16 %v1165
  %v1301 = vunpack.c.l.b16 %v1166
  %v1302 = vunpack.c.l.b16 %v1167
  %v1303 = vunpack.c.l.b16 %v1168
  %v1304 = vunpack.c.l.b16 %v1169
  %v1305 = vunpack.c.l.b16 %v1170
  %v1306 = vunpack.c.l.b16 %v1171
  %v1307 = vunpack.c.l.b16 %v1172
  %v1308 = vunpack.c.l.b16 %v1173
  %v1309 = vunpack.c.l.b16 %v1174
  %v1310 = vunpack.c.l.b16 %v1175
  %v1311 = vunpack.c.l.b16 %v1176
  %v1312 = vunpack.c.l.b16 %v1177
  %v1313 = vunpack.c.l.b16 %v1178
  %v1314 = vunpack.c.l.b16 %v1179
  %v1315 = vunpack.c.l.b16 %v1180
  %v1316 = vunpack.c.l.b16 %v1181
  %v1317 = vunpack.c.l.b16 %v1182
  %v1318 = vunpack.c.l.b16 %v1183
  %v1319 = vunpack.c.l.b16 %v1184
  %v1320 = vunpack.c.l.b16 %v1185
  %v1321 = vunpack.c.l.b16 %v1186
  %v1322 = vunpack.c.l.b16 %v1187
  %v1323 = vunpack.c.l.b16 %v1188
  %v1324 = vunpack.c.l.b16 %v1189
  %v1325 = vunpack.c.l.b16 %v1190
  %v1326 = vunpack.c.l.b16 %v1191
  %v1327 = vunpack.c.l.b16 %v1192
  %v1328 = vunpack.c.l.b16 %v1193
  %v1329 = vunpack.c.l.b16 %v1194
  %v1330 = vunpack.c.l.b16 %v1195
  %v1331 = vunpack.c.l.b16 %v1196
  %v1332 = vunpack.c.l.b16 %v1197
  %v1333 = vunpack.c.l.b16 %v1198
  %v1334 = vunpack.c.l.b16 %v1199
  %v1335 = vunpack.c.l.b16 %v1200
  %v1336 = vunpack.c.l.b16 %v1201
  %v1337 = vunpack.c.l.b16 %v1202
  %v1338 = vunpack.c.l.b16 %v1203
  %v1339 = vunpack.c.l.b16 %v1204
  %v1340 = vunpack.c.l.b16 %v1205
  %v1341 = vunpack.c.l.b16 %v1206
  %v1342 = vunpack.c.l.b16 %v1207
  %v1343 = vunpack.c.l.b16 %v1208
  %v1344 = vunpack.c.l.b16 %v1209
  %v1345 = vunpack.c.l.b16 %v1210
  %v1346 = vunpack.c.l.b16 %v1211
  %v1347 = vunpack.c.l.b16 %v1212
  %v1348 = vunpack.c.l.b16 %v1213
  %v1349 = vunpack.c.l.b16 %v1214
  %v1350 = vunpack.c.l.b16 %v1215
  %v1351 = vunpack.c.l.b16 %v1216
  %v1352 = vunpack.c.l.b16 %v1217
  %v1353 = vpack.c.b16 %v1290, %v1289
  %v1354 = vpack.c.b16 %v1292, %v1291
  %v1355 = vpack.c.b16 %v1294, %v1293
  %v1356 = vpack.c.b16 %v1296, %v1295
  %v1357 = vpack.c.b16 %v1298, %v1297
  %v1358 = vpack.c.b16 %v1300, %v1299
  %v1359 = vpack.c.b16 %v1302, %v1301
  %v1360 = vpack.c.b16 %v1304, %v1303
  %v1361 = vpack.c.b16 %v1306, %v1305
  %v1362 = vpack.c.b16 %v1308, %v1307
  %v1363 = vpack.c.b16 %v1310, %v1309
  %v1364 = vpack.c.b16 %v1312, %v1311
  %v1365 = vpack.c.b16 %v1314, %v1313
  %v1366 = vpack.c.b16 %v1316, %v1315
  %v1367 = vpack.c.b16 %v1318, %v1317
  %v1368 = vpack.c.b16 %v1320, %v1319
  %v1369 = vpack.c.b16 %v1322, %v1321
  %v1370 = vpack.c.b16 %v1324, %v1323
  %v1371 = vpack.c.b16 %v1326, %v1325
  %v1372 = vpack.c.b16 %v1328, %v1327
  %v1373 = vpack.c.b16 %v1330, %v1329
  %v1374 = vpack.c.b16 %v1332, %v1331
  %v1375 = vpack.c.b16 %v1334, %v1333
  %v1376 = vpack.c.b16 %v1336, %v1335
  %v1377 = vpack.c.b16 %v1338, %v1337
  %v1378 = vpack.c.b16 %v1340, %v1339
  %v1379 = vpack.c.b16 %v1342, %v1341
  %v1380 = vpack.c.b16 %v1344, %v1343
  %v1381 = vpack.c.b16 %v1346, %v1345
  %v1382 = vpack.c.b16 %v1348, %v1347
  %v1383 = vpack.c.b16 %v1350, %v1349
  %v1384 = vpack.c.b16 %v1352, %v1351
  %1417 = vmatprep.subr.bf16.mxu0 0
  %1418 = vmatpush1.bf16.msra.mxu0 %v1360
  %1419 = vmatprep.subr.bf16.mxu0 0
  %1420 = vmatpush1.bf16.msra.mxu0 %v1359
  %1421 = vmatprep.subr.bf16.mxu0 0
  %1422 = vmatpush1.bf16.msra.mxu0 %v1358
  %1423 = vmatprep.subr.bf16.mxu0 0
  %1424 = vmatpush1.bf16.msra.mxu0 %v1357
  %1425 = vmatprep.subr.bf16.mxu0 0
  %1426 = vmatpush1.bf16.msra.mxu0 %v1356
  %1427 = vmatprep.subr.bf16.mxu0 0
  %1428 = vmatpush1.bf16.msra.mxu0 %v1355
  %1429 = vmatprep.subr.bf16.mxu0 0
  %1430 = vmatpush1.bf16.msra.mxu0 %v1354
  %1431 = vmatprep.subr.bf16.mxu0 0
  %1432 = vmatpush1.bf16.msra.mxu0 %v1353
  %1433 = vmatprep.subr.bf16.mxu0 0
  %1434 = vmatpush2.bf16.msra.mxu0 %v1368
  %1435 = vmatprep.subr.bf16.mxu0 0
  %1436 = vmatpush2.bf16.msra.mxu0 %v1367
  %1437 = vmatprep.subr.bf16.mxu0 0
  %1438 = vmatpush2.bf16.msra.mxu0 %v1366
  %1439 = vmatprep.subr.bf16.mxu0 0
  %1440 = vmatpush2.bf16.msra.mxu0 %v1365
  %1441 = vmatprep.subr.bf16.mxu0 0
  %1442 = vmatpush2.bf16.msra.mxu0 %v1364
  %1443 = vmatprep.subr.bf16.mxu0 0
  %1444 = vmatpush2.bf16.msra.mxu0 %v1363
  %1445 = vmatprep.subr.bf16.mxu0 0
  %1446 = vmatpush2.bf16.msra.mxu0 %v1362
  %1447 = vmatprep.subr.bf16.mxu0 0
  %1448 = vmatpush2.bf16.msra.mxu0 %v1361
  %1449 = vmatprep.mubr.bf16.mxu0 %v1151
  %1450 = vmatmul.mubr.bf16.gmra.mxu0 %v1150
  %v1451 = vpop.f32.mrf.mxu0
  %v1452 = vadd.f32 %v1223, %v1451
  %v1453 = vpop.f32.mrf.mxu0
  %v1454 = vpop.f32.mrf.mxu0
  %v1455 = vpop.f32.mrf.mxu0
  %1456 = vdwg.mxu0
  %1457 = vmatprep.subr.bf16.mxu0 0
  %1458 = vmatpush1.bf16.msra.mxu0 %v1376
  %1459 = vmatprep.subr.bf16.mxu0 0
  %1460 = vmatpush1.bf16.msra.mxu0 %v1375
  %1461 = vmatprep.subr.bf16.mxu0 0
  %1462 = vmatpush1.bf16.msra.mxu0 %v1374
  %1463 = vmatprep.subr.bf16.mxu0 0
  %1464 = vmatpush1.bf16.msra.mxu0 %v1373
  %1465 = vmatprep.subr.bf16.mxu0 0
  %1466 = vmatpush1.bf16.msra.mxu0 %v1372
  %1467 = vmatprep.subr.bf16.mxu0 0
  %1468 = vmatpush1.bf16.msra.mxu0 %v1371
  %1469 = vmatprep.subr.bf16.mxu0 0
  %1470 = vmatpush1.bf16.msra.mxu0 %v1370
  %1471 = vmatprep.subr.bf16.mxu0 0
  %1472 = vmatpush1.bf16.msra.mxu0 %v1369
  %1473 = vmatprep.subr.bf16.mxu0 0
  %1474 = vmatpush2.bf16.msra.mxu0 %v1384
  %1475 = vmatprep.subr.bf16.mxu0 0
  %1476 = vmatpush2.bf16.msra.mxu0 %v1383
  %1477 = vmatprep.subr.bf16.mxu0 0
  %1478 = vmatpush2.bf16.msra.mxu0 %v1382
  %1479 = vmatprep.subr.bf16.mxu0 0
  %1480 = vmatpush2.bf16.msra.mxu0 %v1381
  %1481 = vmatprep.subr.bf16.mxu0 0
  %1482 = vmatpush2.bf16.msra.mxu0 %v1380
  %1483 = vmatprep.subr.bf16.mxu0 0
  %1484 = vmatpush2.bf16.msra.mxu0 %v1379
  %1485 = vmatprep.subr.bf16.mxu0 0
  %1486 = vmatpush2.bf16.msra.mxu0 %v1378
  %1487 = vmatprep.subr.bf16.mxu0 0
  %1488 = vmatpush2.bf16.msra.mxu0 %v1377
  %1489 = vmatprep.mubr.bf16.mxu0 %v1153
  %1490 = vmatmul.mubr.bf16.gmra.mxu0 %v1152
  %v1491 = vpop.f32.mrf.mxu0
  %v1492 = vadd.f32 %v1452, %v1491
  %v1493 = vpop.f32.mrf.mxu0
  %v1494 = vpop.f32.mrf.mxu0
  %v1495 = vpop.f32.mrf.mxu0
  %1496 = vdwg.mxu0
  %v1497 = vtanh.pop %v1492
  %v1498 = vmul.f32 %v1497, 2.0
  %1499 = vst [vmem:[%s7] sm:$0xff] %v1498
  // Predicated region
  $region30: #{actor_forward.1} parent=0 // pred_check
    _
  $region31: #{actor_forward.1} parent=0 // pred_check_branch
    %1501 = sbr.rel (0) target = $region33
  $region32: #{actor_forward.1} parent=0 // pred_region
    _
  $region33: #{actor_forward.1} parent=0 // pred_fallthru
    _
  // Predicated region
  $region34: #{actor_forward.1} parent=0 // pred_check
    _
  $region35: #{actor_forward.1} parent=0 // pred_check_branch
    %1503 = sbr.rel (0) target = $region37
  $region36: #{actor_forward.1} parent=0 // pred_region
    _
  $region37: #{actor_forward.1} parent=0 // pred_fallthru
    _

</llo_original>
